<compile_context>
chip_gen: v6e
topology: v6e:2x2x1
jax: 0.10.0
libtpu: 0.0.40
codegen_flags: <defaults>
</compile_context>

<pallas_src>
import functools

import jax
import jax.numpy as jnp
from jax.experimental import pallas as pl
from jax.experimental.pallas import tpu as pltpu


def _round_up(x, m):
    return ((x + m - 1) // m) * m


@functools.lru_cache(maxsize=1)
def _vmem_cap_bytes():
    """~80% of physical VMEM (headroom for Mosaic internal scratch)."""
    phys = 64 << 20  # conservative default (fits v7x)
    try:
        info = pltpu.get_tpu_info()
        phys = int(getattr(info, "vmem_capacity_bytes", phys) or phys)
    except Exception:
        pass
    return int(phys * 0.8)


def prepare_mlp_params(w1, b1, w2, b2, lane_multiple=128):
    """Pad the hidden dim + cast weights to bf16 ONCE; reuse across forward calls.

    w1: [din, dh], b1: [dh] or [1, dh], w2: [dh, dout], b2: [dout] or [1, dout].
    Zero-padding of dh is exact: padded hidden lanes are relu(0 + 0) = 0 and the
    matching w2 rows are 0, so they never contaminate real outputs.
    Use lane_multiple=256 on v6e/v7x (2x256x256 MXU) when dh is large.
    """
    din, dh = w1.shape
    dout = w2.shape[1]
    dh_p = _round_up(dh, lane_multiple)
    w1p = jnp.zeros((din, dh_p), jnp.bfloat16).at[:, :dh].set(w1.astype(jnp.bfloat16))
    b1p = jnp.zeros((1, dh_p), jnp.float32).at[:, :dh].set(
        b1.reshape(1, -1).astype(jnp.float32))
    w2p = jnp.zeros((dh_p, dout), jnp.bfloat16).at[:dh, :].set(w2.astype(jnp.bfloat16))
    b2p = b2.reshape(1, -1).astype(jnp.float32)
    return w1p, b1p, w2p, b2p


def mlp_kernel(x_ref, w1_ref, b1_ref, w2_ref, b2_ref, o_ref, *, hidden_chunk):
    # In-kernel bf16 cast of the streamed activation tile (native dtype in HBM).
    x = x_ref[...].astype(jnp.bfloat16)                     # (tb, din) bf16
    tb = x_ref.shape[0]
    dh_p = w1_ref.shape[1]
    dout = o_ref.shape[1]

    y = jnp.zeros((tb, dout), jnp.float32)
    # Stream the hidden dim: bounds the f32 intermediate to (tb, hidden_chunk)
    # and lets the VPU epilogue of chunk k hide under the MXU of chunk k+1.
    for k0 in range(0, dh_p, hidden_chunk):
        k1 = min(k0 + hidden_chunk, dh_p)
        h = jnp.dot(x, w1_ref[:, k0:k1],
                    preferred_element_type=jnp.float32)     # (tb, ch) f32
        h = jnp.maximum(h + b1_ref[:, k0:k1], 0.0)          # bias + ReLU in f32 (v5e-safe)
        y = y + jnp.dot(h.astype(jnp.bfloat16), w2_ref[k0:k1, :],
                        preferred_element_type=jnp.float32)  # accumulate f32
    o_ref[...] = (y + b2_ref[...]).astype(o_ref.dtype)       # unpadded store


@functools.partial(jax.jit, static_argnames=("block_b",))
def regular_mlp_forward(x, w1p, b1p, w2p, b2p, *, block_b=512):
    """x: [B, din] (any float dtype); params from prepare_mlp_params -> [B, dout]."""
    B, din = x.shape
    dh_p = w1p.shape[1]
    dout = w2p.shape[1]

    # Batch tile: multiple of 16 for bf16 sublane packing; no batch padding.
    tb = min(_round_up(block_b, 16), _round_up(B, 16))
    # Keep >=2 grid steps when the batch allows, so the "parallel" axis can
    # actually shard across two TensorCores (v7x megacore).
    if tb >= B > 16:
        tb = max(16, _round_up((B + 1) // 2, 16))
    grid = (pl.cdiv(B, tb),)

    hidden_chunk = min(dh_p, 512)

    # Resident weight/bias footprint; single-buffer them when doubling would eat
    # a meaningful slice of VMEM (constant index_map -> 2nd buffer is pure waste).
    resident = (w1p.size + w2p.size) * 2 + (b1p.size + b2p.size) * 4
    cap = _vmem_cap_bytes()
    if 2 * resident > cap // 4:
        w_kwargs = {"pipeline_mode": pl.Buffered(1)}
        wbuf = 1
    else:
        w_kwargs = {}
        wbuf = 2

    x_bytes = x.dtype.itemsize
    est = (
        2 * tb * din * x_bytes          # streamed x tiles (double-buffered)
        + 2 * tb * dout * x_bytes       # streamed output tiles (double-buffered)
        + wbuf * resident               # VMEM-resident weights/biases
        + tb * hidden_chunk * 6         # f32 hidden chunk + bf16 copy
        + tb * dout * 4                 # f32 output accumulator
    )
    vmem_limit = int(min(max(2 * est, 8 << 20), cap))

    flops = 2 * B * (din * dh_p + dh_p * dout)
    bytes_accessed = (B * din + B * dout) * x_bytes + resident

    return pl.pallas_call(
        functools.partial(mlp_kernel, hidden_chunk=hidden_chunk),
        out_shape=jax.ShapeDtypeStruct((B, dout), x.dtype),
        grid_spec=pltpu.PrefetchScalarGridSpec(
            num_scalar_prefetch=0,
            grid=grid,
            in_specs=[
                pl.BlockSpec((tb, din), lambda i: (i, 0)),                # x: stream
                pl.BlockSpec((din, dh_p), lambda i: (0, 0), **w_kwargs),  # w1: resident
                pl.BlockSpec((1, dh_p), lambda i: (0, 0), **w_kwargs),    # b1: resident
                pl.BlockSpec((dh_p, dout), lambda i: (0, 0), **w_kwargs), # w2: resident
                pl.BlockSpec((1, dout), lambda i: (0, 0), **w_kwargs),    # b2: resident
            ],
            out_specs=pl.BlockSpec((tb, dout), lambda i: (i, 0)),
        ),
        compiler_params=pltpu.CompilerParams(
            dimension_semantics=("parallel",),   # megacore-shard the batch axis
            vmem_limit_bytes=vmem_limit,
        ),
        cost_estimate=pl.CostEstimate(
            flops=flops, transcendentals=0, bytes_accessed=bytes_accessed),
    )(x, w1p, b1p, w2p, b2p)


def init_params(key, dim_in, dim_out, dim_h, dtype=jnp.float32):
    """Deterministic init mirroring nn.Linear's U(-1/sqrt(fan_in), 1/sqrt(fan_in)).
    Weights are stored pre-transposed as [in, out] so the kernel computes x @ W + b
    (same math as PyTorch's x @ W.T + b)."""
    k1, k2, k3, k4 = jax.random.split(key, 4)
    lim1 = 1.0 / (dim_in ** 0.5)
    lim2 = 1.0 / (dim_h ** 0.5)
    w1 = jax.random.uniform(k1, (dim_in, dim_h), dtype, minval=-lim1, maxval=lim1)
    b1 = jax.random.uniform(k2, (1, dim_h), dtype, minval=-lim1, maxval=lim1)
    w2 = jax.random.uniform(k3, (dim_h, dim_out), dtype, minval=-lim2, maxval=lim2)
    b2 = jax.random.uniform(k4, (1, dim_out), dtype, minval=-lim2, maxval=lim2)
    return w1, b1, w2, b2


if __name__ == "__main__":
    # Shapes consistent with RegularMLP(dim_in, dim_out, dim_h); batch chosen so
    # the grid has several steps plus a ragged last block (masked by Pallas).
    batch, dim_in, dim_h, dim_out = 200, 32, 64, 16

    key = jax.random.PRNGKey(0)
    kx, kp = jax.random.split(key)
    x = jax.random.normal(kx, (batch, dim_in), jnp.float32)
    w1, b1, w2, b2 = init_params(kp, dim_in, dim_out, dim_h)

    # Pad/cast the weights ONCE (hoisted out of the per-call forward).
    params = prepare_mlp_params(w1, b1, w2, b2)
    params = jax.block_until_ready(params)
    w1p, b1p, w2p, b2p = params

    out = regular_mlp_forward(x, w1p, b1p, w2p, b2p, block_b=64)
    out = jax.block_until_ready(out)
    assert out.shape == (batch, dim_out)
    assert out.dtype == x.dtype

    # bf16-consistent reference (same math as the kernel: bf16 operands, f32
    # accumulation, f32 bias/ReLU) -- should match tightly.
    xb, w1b, w2b = (t.astype(jnp.bfloat16) for t in (x, w1, w2))
    h_ref = jnp.maximum(jnp.dot(xb, w1b, preferred_element_type=jnp.float32) + b1, 0.0)
    ref_bf16 = jnp.dot(h_ref.astype(jnp.bfloat16), w2b,
                       preferred_element_type=jnp.float32) + b2
    assert jnp.allclose(out, ref_bf16, atol=5e-3, rtol=5e-3)

    # Full-f32 reference (PyTorch semantics) -- relaxed tolerance because the
    # kernel feeds the MXU bf16 operands (f32 accumulation).
    ref_f32 = jnp.maximum(x @ w1 + b1, 0.0) @ w2 + b2
    assert jnp.allclose(out, ref_f32, atol=1e-1, rtol=1e-1)

    print("KERNEL_OK")
</pallas_src>

<mosaic_0001>
module attributes {stable_mosaic.version = 11 : i64} {
  func.func @mlp_kernel(%arg0: i32, %arg1: memref<64x32xf32, #tpu.memory_space<vmem>>, %arg2: memref<32x128xbf16, #tpu.memory_space<vmem>>, %arg3: memref<1x128xf32, #tpu.memory_space<vmem>>, %arg4: memref<128x16xbf16, #tpu.memory_space<vmem>>, %arg5: memref<1x16xf32, #tpu.memory_space<vmem>>, %arg6: memref<64x16xf32, #tpu.memory_space<vmem>>) attributes {dimension_semantics = [#tpu.dimension_semantics<parallel>], iteration_bounds = array<i64: 4>, scalar_prefetch = 0 : i64, scratch_operands = 0 : i64, tpu.core_type = #tpu.core_type<tc>, window_params = [{transform_indices = @transform_0, window_bounds = array<i64: 64, 32>}, {pipeline_mode = #tpu.pipeline_mode<synchronous>, transform_indices = @transform_1, window_bounds = array<i64: 32, 128>}, {pipeline_mode = #tpu.pipeline_mode<synchronous>, transform_indices = @transform_2, window_bounds = array<i64: 1, 128>}, {pipeline_mode = #tpu.pipeline_mode<synchronous>, transform_indices = @transform_3, window_bounds = array<i64: 128, 16>}, {pipeline_mode = #tpu.pipeline_mode<synchronous>, transform_indices = @transform_4, window_bounds = array<i64: 1, 16>}, {transform_indices = @transform_5, window_bounds = array<i64: 64, 16>}]} {
    %c0 = arith.constant 0 : index
    %c0_0 = arith.constant 0 : index
    %0 = vector.load %arg1[%c0, %c0_0] : memref<64x32xf32, #tpu.memory_space<vmem>>, vector<64x32xf32>
    %1 = arith.truncf %0 : vector<64x32xf32> to vector<64x32xbf16>
    %cst = arith.constant 0.000000e+00 : f32
    %2 = vector.broadcast %cst : f32 to vector<64x16xf32>
    %c0_1 = arith.constant 0 : index
    %c0_2 = arith.constant 0 : index
    %3 = vector.load %arg2[%c0_1, %c0_2] : memref<32x128xbf16, #tpu.memory_space<vmem>>, vector<32x128xbf16>
    %cst_3 = arith.constant dense<0.000000e+00> : vector<64x128xf32>
    %4 = tpu.matmul %1, %3, %cst_3 {dimension_numbers = #tpu.dot_dimension_numbers<[1], [0], [0], [1], [0, 0, 1, 1], [], []>} : vector<64x32xbf16>, vector<32x128xbf16>, vector<64x128xf32> -> vector<64x128xf32>
    %c0_4 = arith.constant 0 : index
    %c0_5 = arith.constant 0 : index
    %5 = vector.load %arg3[%c0_4, %c0_5] : memref<1x128xf32, #tpu.memory_space<vmem>>, vector<1x128xf32>
    %6 = vector.broadcast %5 : vector<1x128xf32> to vector<64x128xf32>
    %7 = arith.addf %4, %6 : vector<64x128xf32>
    %cst_6 = arith.constant 0.000000e+00 : f32
    %8 = vector.broadcast %cst_6 : f32 to vector<64x128xf32>
    %9 = arith.maximumf %7, %8 : vector<64x128xf32>
    %10 = arith.truncf %9 : vector<64x128xf32> to vector<64x128xbf16>
    %c0_7 = arith.constant 0 : index
    %c0_8 = arith.constant 0 : index
    %11 = vector.load %arg4[%c0_7, %c0_8] : memref<128x16xbf16, #tpu.memory_space<vmem>>, vector<128x16xbf16>
    %cst_9 = arith.constant dense<0.000000e+00> : vector<64x16xf32>
    %12 = tpu.matmul %10, %11, %cst_9 {dimension_numbers = #tpu.dot_dimension_numbers<[1], [0], [0], [1], [0, 0, 1, 1], [], []>} : vector<64x128xbf16>, vector<128x16xbf16>, vector<64x16xf32> -> vector<64x16xf32>
    %13 = arith.addf %2, %12 : vector<64x16xf32>
    %c0_10 = arith.constant 0 : index
    %c0_11 = arith.constant 0 : index
    %14 = vector.load %arg5[%c0_10, %c0_11] : memref<1x16xf32, #tpu.memory_space<vmem>>, vector<1x16xf32>
    %15 = vector.broadcast %14 : vector<1x16xf32> to vector<64x16xf32>
    %16 = arith.addf %13, %15 : vector<64x16xf32>
    %c0_12 = arith.constant 0 : index
    %c0_13 = arith.constant 0 : index
    %17 = vector.load %arg6[%c0_12, %c0_13] : memref<64x16xf32, #tpu.memory_space<vmem>>, vector<64x16xf32>
    tpu.vector_store %arg6[%c0_12, %c0_13], %16 {strides = array<i32>} : memref<64x16xf32, #tpu.memory_space<vmem>>, vector<64x16xf32>,
    return
  }
  func.func @transform_0(%arg0: i32) -> (i32, i32) {
    %c0_i32 = arith.constant 0 : i32
    %c0_i32_0 = arith.constant 0 : i32
    return %arg0, %c0_i32 : i32, i32
  }
  func.func @transform_1(%arg0: i32) -> (i32, i32) {
    %c0_i32 = arith.constant 0 : i32
    %c0_i32_0 = arith.constant 0 : i32
    %c0_i32_1 = arith.constant 0 : i32
    return %c0_i32, %c0_i32_0 : i32, i32
  }
  func.func @transform_2(%arg0: i32) -> (i32, i32) {
    %c0_i32 = arith.constant 0 : i32
    %c0_i32_0 = arith.constant 0 : i32
    %c0_i32_1 = arith.constant 0 : i32
    return %c0_i32, %c0_i32_0 : i32, i32
  }
  func.func @transform_3(%arg0: i32) -> (i32, i32) {
    %c0_i32 = arith.constant 0 : i32
    %c0_i32_0 = arith.constant 0 : i32
    %c0_i32_1 = arith.constant 0 : i32
    return %c0_i32, %c0_i32_0 : i32, i32
  }
  func.func @transform_4(%arg0: i32) -> (i32, i32) {
    %c0_i32 = arith.constant 0 : i32
    %c0_i32_0 = arith.constant 0 : i32
    %c0_i32_1 = arith.constant 0 : i32
    return %c0_i32, %c0_i32_0 : i32, i32
  }
  func.func @transform_5(%arg0: i32) -> (i32, i32) {
    %c0_i32 = arith.constant 0 : i32
    %c0_i32_0 = arith.constant 0 : i32
    return %arg0, %c0_i32 : i32, i32
  }
}

</mosaic_0001>

<llo_original>
// kernel: regular_mlp_forward.1
$region0: #{regular_mlp_forward.1}
  #allocation0 [shape = 'u32[]', space=smem, size = 0x4, offset = 0x4, fixed_abs, tag = 'smem constant byte address 0x4 - core index']
  #allocation1 [shape = 'u32[144,128]{1,0:T(1,128)}', space=vmem, size = 0x12000, scoped, tag = 'internal scratch']
  %s0 = inlined_call_operand.vmem [shape: f32[200,32], index: 0, kind: input, shape index: {}]
  %s1 = inlined_call_operand.vmem [shape: bf16[32,128], index: 1, kind: input, shape index: {}]
  %s2 = inlined_call_operand.vmem [shape: f32[1,128], index: 2, kind: input, shape index: {}]
  %s3 = inlined_call_operand.vmem [shape: bf16[128,16], index: 3, kind: input, shape index: {}]
  %s4 = inlined_call_operand.vmem [shape: f32[1,16], index: 4, kind: input, shape index: {}]
  %s5 = inlined_call_operand.vmem [shape: f32[200,16], index: 5, kind: output, shape index: {}]
  %s6 = sld [smem:[#allocation0]]
  $region101: #{regular_mlp_forward.1} parent=0
    _
  %s8 = ssub.s32 1, %s6
  %s9 = scalar_select 0, %s8, %s6
  $region1: #{regular_mlp_forward.1} parent=0
    #allocation2 [shape = 'u8[65536]{0}', space=vmem, size = 0x10000, scoped, tag = 'output window, operand 0']
    loop: start=0, step=1, limit=6
    $region2: #{regular_mlp_forward.1} parent=1 // loop_pre_header
      _
    $region3: #{regular_mlp_forward.1} parent=1 // loop_header
      %s11 = sphi 0, %s15
      %p12 = scmp.ge.s32.totalorder %s11, 6
      %s21 = sphi 0, %s23
      %s24 = sphi 0, %s21
      %s25 = sphi 0, %s24
      %s41 = sphi 0, %s25
      %s45 = sphi 0, %s45
      %s47 = sphi 0, %s45
      %s48 = sphi 0, %s47
      %s62 = sphi 0, %s48
      %s66 = sphi 0, %s66
      %s68 = sphi 0, %s66
      %s69 = sphi 0, %s68
      %s83 = sphi 0, %s69
      %s87 = sphi 0, %s87
      %s89 = sphi 0, %s87
      %s90 = sphi 0, %s89
      %s104 = sphi 0, %s90
      %s108 = sphi 0, %s108
      %s110 = sphi 0, %s108
      %s111 = sphi 0, %s110
      %s125 = sphi 0, %s111
      %s131 = sphi 0, %s133
      %s134 = sphi 0, %s131
      %s135 = sphi 0, %s134
      %s151 = sphi 0, %s135
    $region4: #{regular_mlp_forward.1} parent=1 // loop_header_branch
      %14 = sbr.rel (%p12) target = $region8
    $region5: #{regular_mlp_forward.1} parent=1 // loop_body
      %s16 = ssub.s32 %s11, 1
      %s17 = ssub.s32 %s11, 2
      %s18 = sadd.s32 %s11, 1
      %s19 = ssub.s32 %s11, %s18
      %p20 = scmp.eq.s32.totalorder %s19, 0
      %s22 = sadd.s32 %s21, 1
      %s23 = scalar_select %p20, %s21, %s22
      %p26 = pneg %p20
      %p27 = scmp.eq.s32.totalorder %s11, 3
      %p28 = por %p26, %p27
      %p29 = scmp.ne.s32.totalorder %s21, %s24
      %p30 = scmp.eq.s32.totalorder %s11, 0
      %p31 = por %p29, %p30
      %p32 = scmp.ne.s32.totalorder %s21, %s24
      %p33 = scmp.eq.s32.totalorder %s16, 3
      %p34 = por %p32, %p33
      %p35 = scmp.ne.s32.totalorder %s24, %s25
      %p36 = scmp.eq.s32.totalorder %s16, 0
      %p37 = por %p35, %p36
      %p38 = scmp.ne.s32.totalorder %s24, %s25
      %p39 = scmp.eq.s32.totalorder %s17, 3
      %p40 = por %p38, %p39
      %p42 = scmp.ne.s32.totalorder %s25, %s41
      %p43 = scmp.eq.s32.totalorder %s17, 0
      %p44 = por %p42, %p43
      %s46 = sadd.s32 %s45, 1
      %p49 = scmp.eq.s32.totalorder %s11, 3
      %p50 = scmp.ne.s32.totalorder %s45, %s47
      %p51 = scmp.eq.s32.totalorder %s11, 0
      %p52 = por %p50, %p51
      %p53 = scmp.ne.s32.totalorder %s45, %s47
      %p54 = scmp.eq.s32.totalorder %s16, 3
      %p55 = por %p53, %p54
      %p56 = scmp.ne.s32.totalorder %s47, %s48
      %p57 = scmp.eq.s32.totalorder %s16, 0
      %p58 = por %p56, %p57
      %p59 = scmp.ne.s32.totalorder %s47, %s48
      %p60 = scmp.eq.s32.totalorder %s17, 3
      %p61 = por %p59, %p60
      %p63 = scmp.ne.s32.totalorder %s48, %s62
      %p64 = scmp.eq.s32.totalorder %s17, 0
      %p65 = por %p63, %p64
      %s67 = sadd.s32 %s66, 1
      %p70 = scmp.eq.s32.totalorder %s11, 3
      %p71 = scmp.ne.s32.totalorder %s66, %s68
      %p72 = scmp.eq.s32.totalorder %s11, 0
      %p73 = por %p71, %p72
      %p74 = scmp.ne.s32.totalorder %s66, %s68
      %p75 = scmp.eq.s32.totalorder %s16, 3
      %p76 = por %p74, %p75
      %p77 = scmp.ne.s32.totalorder %s68, %s69
      %p78 = scmp.eq.s32.totalorder %s16, 0
      %p79 = por %p77, %p78
      %p80 = scmp.ne.s32.totalorder %s68, %s69
      %p81 = scmp.eq.s32.totalorder %s17, 3
      %p82 = por %p80, %p81
      %p84 = scmp.ne.s32.totalorder %s69, %s83
      %p85 = scmp.eq.s32.totalorder %s17, 0
      %p86 = por %p84, %p85
      %s88 = sadd.s32 %s87, 1
      %p91 = scmp.eq.s32.totalorder %s11, 3
      %p92 = scmp.ne.s32.totalorder %s87, %s89
      %p93 = scmp.eq.s32.totalorder %s11, 0
      %p94 = por %p92, %p93
      %p95 = scmp.ne.s32.totalorder %s87, %s89
      %p96 = scmp.eq.s32.totalorder %s16, 3
      %p97 = por %p95, %p96
      %p98 = scmp.ne.s32.totalorder %s89, %s90
      %p99 = scmp.eq.s32.totalorder %s16, 0
      %p100 = por %p98, %p99
      %p101 = scmp.ne.s32.totalorder %s89, %s90
      %p102 = scmp.eq.s32.totalorder %s17, 3
      %p103 = por %p101, %p102
      %p105 = scmp.ne.s32.totalorder %s90, %s104
      %p106 = scmp.eq.s32.totalorder %s17, 0
      %p107 = por %p105, %p106
      %s109 = sadd.s32 %s108, 1
      %p112 = scmp.eq.s32.totalorder %s11, 3
      %p113 = scmp.ne.s32.totalorder %s108, %s110
      %p114 = scmp.eq.s32.totalorder %s11, 0
      %p115 = por %p113, %p114
      %p116 = scmp.ne.s32.totalorder %s108, %s110
      %p117 = scmp.eq.s32.totalorder %s16, 3
      %p118 = por %p116, %p117
      %p119 = scmp.ne.s32.totalorder %s110, %s111
      %p120 = scmp.eq.s32.totalorder %s16, 0
      %p121 = por %p119, %p120
      %p122 = scmp.ne.s32.totalorder %s110, %s111
      %p123 = scmp.eq.s32.totalorder %s17, 3
      %p124 = por %p122, %p123
      %p126 = scmp.ne.s32.totalorder %s111, %s125
      %p127 = scmp.eq.s32.totalorder %s17, 0
      %p128 = por %p126, %p127
      %s129 = ssub.s32 %s11, %s18
      %p130 = scmp.eq.s32.totalorder %s129, 0
      %s132 = sadd.s32 %s131, 1
      %s133 = scalar_select %p130, %s131, %s132
      %p136 = pneg %p130
      %p137 = scmp.eq.s32.totalorder %s11, 3
      %p138 = por %p136, %p137
      %p139 = scmp.ne.s32.totalorder %s131, %s134
      %p140 = scmp.eq.s32.totalorder %s11, 0
      %p141 = por %p139, %p140
      %p142 = scmp.ne.s32.totalorder %s131, %s134
      %p143 = scmp.eq.s32.totalorder %s16, 3
      %p144 = por %p142, %p143
      %p145 = scmp.ne.s32.totalorder %s134, %s135
      %p146 = scmp.eq.s32.totalorder %s16, 0
      %p147 = por %p145, %p146
      %p148 = scmp.ne.s32.totalorder %s134, %s135
      %p149 = scmp.eq.s32.totalorder %s17, 3
      %p150 = por %p148, %p149
      %p152 = scmp.ne.s32.totalorder %s135, %s151
      %p153 = scmp.eq.s32.totalorder %s17, 0
      %p154 = por %p152, %p153
      %p155 = scmp.le.s32.totalorder 1, %s11
      %p156 = scmp.lt.s32.totalorder %s11, 5
      %p157 = pnand %p155, %p156
      %p158 = pneg %p157
      // Predicated region
      $region9: #{regular_mlp_forward.1} parent=5 // pred_check
        _
      $region10: #{regular_mlp_forward.1} parent=5 // pred_check_branch
        %160 = sbr.rel (%p157) target = $region12
      $region11: #{regular_mlp_forward.1} parent=5 // pred_region
        %s161 = ssub.s32 %s11, 1
        // Predicated region
        $region13: #{regular_mlp_forward.1} parent=11 // pred_check
          %p162 = pneg %p58
        $region14: #{regular_mlp_forward.1} parent=11 // pred_check_branch
          %164 = sbr.rel (%p162) target = $region16
        $region15: #{regular_mlp_forward.1} parent=11 // pred_region
          _
        $region16: #{regular_mlp_forward.1} parent=11 // pred_fallthru
          _
        // Predicated region
        $region17: #{regular_mlp_forward.1} parent=11 // pred_check
          %p165 = pneg %p79
        $region18: #{regular_mlp_forward.1} parent=11 // pred_check_branch
          %167 = sbr.rel (%p165) target = $region20
        $region19: #{regular_mlp_forward.1} parent=11 // pred_region
          _
        $region20: #{regular_mlp_forward.1} parent=11 // pred_fallthru
          _
        // Predicated region
        $region21: #{regular_mlp_forward.1} parent=11 // pred_check
          %p168 = pneg %p100
        $region22: #{regular_mlp_forward.1} parent=11 // pred_check_branch
          %170 = sbr.rel (%p168) target = $region24
        $region23: #{regular_mlp_forward.1} parent=11 // pred_region
          _
        $region24: #{regular_mlp_forward.1} parent=11 // pred_fallthru
          _
        // Predicated region
        $region25: #{regular_mlp_forward.1} parent=11 // pred_check
          %p171 = pneg %p121
        $region26: #{regular_mlp_forward.1} parent=11 // pred_check_branch
          %173 = sbr.rel (%p171) target = $region28
        $region27: #{regular_mlp_forward.1} parent=11 // pred_region
          _
        $region28: #{regular_mlp_forward.1} parent=11 // pred_fallthru
          _
      $region12: #{regular_mlp_forward.1} parent=5 // pred_fallthru
        _
      %p174 = scmp.lt.s32.totalorder %s11, 4
      // Predicated region
      $region29: #{regular_mlp_forward.1} parent=5 // pred_check
        %p175 = pneg %p174
      $region30: #{regular_mlp_forward.1} parent=5 // pred_check_branch
        %177 = sbr.rel (%p175) target = $region32
      $region31: #{regular_mlp_forward.1} parent=5 // pred_region
        // Predicated region
        $region33: #{regular_mlp_forward.1} parent=31 // pred_check
          %p178 = pneg %p31
        $region34: #{regular_mlp_forward.1} parent=31 // pred_check_branch
          %180 = sbr.rel (%p178) target = $region36
        $region35: #{regular_mlp_forward.1} parent=31 // pred_region
          %s181 = smul.u32 8, %s11
          %s182 = ssub.s32 25, %s181
          %p183 = scmp.lt.s32.totalorder %s182, 8
          %s184 = scalar_select %p183, %s182, 8
          %s185 = smul.u32 128, %s184
          %p186 = scmp.lt.s32.totalorder %s181, 24
          %s187 = scalar_select %p186, %s181, 24
          %s188 = smul.addr %s187, 8
          %s189 = scalar_lea.vmem %s0, %s188
          %s190 = smul.u32 8, %s11
          %s191 = ssub.s32 25, %s190
          %p192 = scmp.lt.s32.totalorder %s191, 8
          %s193 = scalar_select %p192, %s191, 8
          %s194 = smul.u32 128, %s193
        $region36: #{regular_mlp_forward.1} parent=31 // pred_fallthru
          _
      $region32: #{regular_mlp_forward.1} parent=5 // pred_fallthru
        _
      %p195 = scmp.le.s32.totalorder 1, %s11
      %p196 = scmp.lt.s32.totalorder %s11, 5
      %p197 = pnand %p195, %p196
      %p198 = pneg %p197
      // Predicated region
      $region37: #{regular_mlp_forward.1} parent=5 // pred_check
        _
      $region38: #{regular_mlp_forward.1} parent=5 // pred_check_branch
        %200 = sbr.rel (%p197) target = $region40
      $region39: #{regular_mlp_forward.1} parent=5 // pred_region
        %s201 = ssub.s32 %s11, 1
        %s202 = smul.u32 8, %s16
        %s203 = ssub.s32 25, %s202
        %p204 = scmp.lt.s32.totalorder %s203, 8
        %s205 = scalar_select %p204, %s203, 8
        %s206 = smul.u32 128, %s205
        %p207 = scmp.lt.s32.totalorder %s202, 24
        %s208 = scalar_select %p207, %s202, 24
        %s209 = smul.addr %s208, 8
        %s210 = scalar_lea.vmem %s0, %s209
        %p211 = pneg %p37
        %p212 = pneg %p34
        %p213 = pneg %p58
        %p214 = pneg %p55
        %p215 = pneg %p79
        %p216 = pneg %p76
        %p217 = pneg %p100
        %p218 = pneg %p97
        %p219 = pneg %p121
        %p220 = pneg %p118
        %p221 = pneg %p147
        %p222 = pneg %p144
        %s223 = sand.u32 %s134, 1
        %s224 = sand.u32 %s134, 1
        %s225 = smul.addr %s224, 64
        %s226 = scalar_lea.vmem [#allocation2], %s225
        %s227 = smul.u32 8, %s16
        %s228 = ssub.s32 25, %s227
        %p229 = scmp.lt.s32.totalorder %s228, 8
        %s230 = scalar_select %p229, %s228, 8
        %s231 = smul.u32 128, %s230
        %p232 = scmp.lt.s32.totalorder %s227, 24
        %s233 = scalar_select %p232, %s227, 24
        %s234 = smul.addr %s233, 8
        %s235 = scalar_lea.vmem %s0, %s234
        %s236 = smul.u32 8, %s16
        %s237 = ssub.s32 25, %s236
        %p238 = scmp.lt.s32.totalorder %s237, 8
        %s239 = scalar_select %p238, %s237, 8
        %s240 = smul.u32 128, %s239
        %s241 = smul.u32 8, %s16
        %s242 = ssub.s32 25, %s241
        %p243 = scmp.lt.s32.totalorder %s242, 8
        %s244 = scalar_select %p243, %s242, 8
        %s245 = smul.u32 128, %s244
        %v247 = vld [vmem:[%s235] sm:$0xff]
        %v248 = vld [vmem:[%s235 + $0x8] sm:$0xff]
        %v249 = vld [vmem:[%s235 + $0x10] sm:$0xff]
        %v250 = vld [vmem:[%s235 + $0x18] sm:$0xff]
        %v251 = vld [vmem:[%s235 + $0x20] sm:$0xff]
        %v252 = vld [vmem:[%s235 + $0x28] sm:$0xff]
        %v253 = vld [vmem:[%s235 + $0x30] sm:$0xff]
        %v254 = vld [vmem:[%s235 + $0x38] sm:$0xff]
        %v255 = vpack.c.bf16 %v248, %v247
        %v256 = vpack.c.bf16 %v250, %v249
        %v257 = vpack.c.bf16 %v252, %v251
        %v258 = vpack.c.bf16 %v254, %v253
        %v259 = vld [vmem:[%s1] sm:$0xf]
        %v260 = vld [vmem:[%s1 + $0x4] sm:$0xf]
        %v261 = vld [vmem:[%s1 + $0x8] sm:$0xf]
        %v262 = vld [vmem:[%s1 + $0xc] sm:$0xf]
        %v263 = vld [vmem:[%s2] sm:$0x1]
        %v265 = vlaneseq
        %v266 = vshrl.u32 %v265, 7
        %v267 = vsub.s32 0, %v266
        %v268 = vrot.slane %v263, %v267
        %v274 = vunpack.c.l.b16 %v259
        %v275 = vunpack.c.l.b16 %v260
        %v276 = vunpack.c.l.b16 %v261
        %v277 = vunpack.c.l.b16 %v262
        %v278 = vpack.c.b16 %v275, %v274
        %v279 = vpack.c.b16 %v277, %v276
        %vm282 = vcmask 261120
        %v284 = vsel %vm282, %v255, 0
        %v287 = vsel %vm282, %v256, 0
        %v290 = vsel %vm282, %v257, 0
        %v293 = vsel %vm282, %v258, 0
        %295 = vmatprep.subr.bf16.mxu0 0
        %296 = vmatpush1.bf16.msra.mxu0 0
        %297 = vmatprep.subr.bf16.mxu0 0
        %298 = vmatpush1.bf16.msra.mxu0 0
        %299 = vmatprep.subr.bf16.mxu0 0
        %300 = vmatpush1.bf16.msra.mxu0 0
        %301 = vmatprep.subr.bf16.mxu0 0
        %302 = vmatpush1.bf16.msra.mxu0 0
        %303 = vmatprep.subr.bf16.mxu0 0
        %304 = vmatpush1.bf16.msra.mxu0 0
        %305 = vmatprep.subr.bf16.mxu0 0
        %306 = vmatpush1.bf16.msra.mxu0 0
        %307 = vmatprep.subr.bf16.mxu0 0
        %308 = vmatpush1.bf16.msra.mxu0 %v279
        %309 = vmatprep.subr.bf16.mxu0 0
        %310 = vmatpush1.bf16.msra.mxu0 %v278
        %311 = vmatprep.subr.bf16.mxu0 0
        %312 = vmatpush2.bf16.msra.mxu0 0
        %313 = vmatprep.subr.bf16.mxu0 0
        %314 = vmatpush2.bf16.msra.mxu0 0
        %315 = vmatprep.subr.bf16.mxu0 0
        %316 = vmatpush2.bf16.msra.mxu0 0
        %317 = vmatprep.subr.bf16.mxu0 0
        %318 = vmatpush2.bf16.msra.mxu0 0
        %319 = vmatprep.subr.bf16.mxu0 0
        %320 = vmatpush2.bf16.msra.mxu0 0
        %321 = vmatprep.subr.bf16.mxu0 0
        %322 = vmatpush2.bf16.msra.mxu0 0
        %323 = vmatprep.subr.bf16.mxu0 0
        %324 = vmatpush2.bf16.msra.mxu0 0
        %325 = vmatprep.subr.bf16.mxu0 0
        %326 = vmatpush2.bf16.msra.mxu0 0
        %327 = vmatprep.mubr.bf16.mxu0 0
        %328 = vmatmul.mubr.bf16.gmra.mxu0 %v284
        %v329 = vpop.f32.mrf.mxu0
        %v330 = vadd.f32 %v268, %v329
        %v331 = vpop.f32.mrf.mxu0
        %v332 = vpop.f32.mrf.mxu0
        %v333 = vadd.f32 %v268, %v332
        %v334 = vpop.f32.mrf.mxu0
        %335 = vmatprep.mubr.bf16.mxu0 0
        %336 = vmatmul.mubr.bf16.gmra.mxu0 %v287
        %v337 = vpop.f32.mrf.mxu0
        %v338 = vadd.f32 %v268, %v337
        %v339 = vpop.f32.mrf.mxu0
        %v340 = vpop.f32.mrf.mxu0
        %v341 = vadd.f32 %v268, %v340
        %v342 = vpop.f32.mrf.mxu0
        %343 = vmatprep.mubr.bf16.mxu0 0
        %344 = vmatmul.mubr.bf16.gmra.mxu0 %v290
        %v345 = vpop.f32.mrf.mxu0
        %v346 = vadd.f32 %v268, %v345
        %v347 = vpop.f32.mrf.mxu0
        %v348 = vpop.f32.mrf.mxu0
        %v349 = vadd.f32 %v268, %v348
        %v350 = vpop.f32.mrf.mxu0
        %351 = vmatprep.mubr.bf16.mxu0 0
        %352 = vmatmul.mubr.bf16.gmra.mxu0 %v293
        %v353 = vpop.f32.mrf.mxu0
        %v354 = vadd.f32 %v268, %v353
        %v355 = vpop.f32.mrf.mxu0
        %v356 = vpop.f32.mrf.mxu0
        %v357 = vadd.f32 %v268, %v356
        %v358 = vpop.f32.mrf.mxu0
        %359 = vdwg.mxu0
        %v360 = vmax.f32 %v330, 0.0
        %v361 = vmax.f32 %v333, 0.0
        %v362 = vmax.f32 %v338, 0.0
        %v363 = vmax.f32 %v341, 0.0
        %v364 = vmax.f32 %v346, 0.0
        %v365 = vmax.f32 %v349, 0.0
        %v366 = vmax.f32 %v354, 0.0
        %v367 = vmax.f32 %v357, 0.0
        %v368 = vpack.c.bf16 %v361, %v360
        %v369 = vpack.c.bf16 %v363, %v362
        %v370 = vpack.c.bf16 %v365, %v364
        %v371 = vpack.c.bf16 %v367, %v366
        %v372 = vld [vmem:[%s3] sm:$0xf]
        %v373 = vld [vmem:[%s3 + $0x4] sm:$0xf]
        %v374 = vld [vmem:[%s3 + $0x8] sm:$0xf]
        %v375 = vld [vmem:[%s3 + $0xc] sm:$0xf]
        %v376 = vld [vmem:[%s3 + $0x10] sm:$0xf]
        %v377 = vld [vmem:[%s3 + $0x14] sm:$0xf]
        %v378 = vld [vmem:[%s3 + $0x18] sm:$0xf]
        %v379 = vld [vmem:[%s3 + $0x1c] sm:$0xf]
        %v380 = vld [vmem:[%s3 + $0x20] sm:$0xf]
        %v381 = vld [vmem:[%s3 + $0x24] sm:$0xf]
        %v382 = vld [vmem:[%s3 + $0x28] sm:$0xf]
        %v383 = vld [vmem:[%s3 + $0x2c] sm:$0xf]
        %v384 = vld [vmem:[%s3 + $0x30] sm:$0xf]
        %v385 = vld [vmem:[%s3 + $0x34] sm:$0xf]
        %v386 = vld [vmem:[%s3 + $0x38] sm:$0xf]
        %v387 = vld [vmem:[%s3 + $0x3c] sm:$0xf]
        %v388 = vld [vmem:[%s4] sm:$0x1]
        %v390 = vlaneseq
        %v391 = vshrl.u32 %v390, 7
        %v392 = vsub.s32 0, %v391
        %v393 = vrot.slane %v388, %v392
        %v411 = vunpack.c.l.b16 %v372
        %v412 = vunpack.c.l.b16 %v373
        %v413 = vunpack.c.l.b16 %v374
        %v414 = vunpack.c.l.b16 %v375
        %v415 = vunpack.c.l.b16 %v376
        %v416 = vunpack.c.l.b16 %v377
        %v417 = vunpack.c.l.b16 %v378
        %v418 = vunpack.c.l.b16 %v379
        %v419 = vunpack.c.l.b16 %v380
        %v420 = vunpack.c.l.b16 %v381
        %v421 = vunpack.c.l.b16 %v382
        %v422 = vunpack.c.l.b16 %v383
        %v423 = vunpack.c.l.b16 %v384
        %v424 = vunpack.c.l.b16 %v385
        %v425 = vunpack.c.l.b16 %v386
        %v426 = vunpack.c.l.b16 %v387
        %v427 = vpack.c.b16 %v412, %v411
        %v428 = vpack.c.b16 %v414, %v413
        %v429 = vpack.c.b16 %v416, %v415
        %v430 = vpack.c.b16 %v418, %v417
        %v431 = vpack.c.b16 %v420, %v419
        %v432 = vpack.c.b16 %v422, %v421
        %v433 = vpack.c.b16 %v424, %v423
        %v434 = vpack.c.b16 %v426, %v425
        %443 = vmatprep.subr.bf16.mxu0 0
        %444 = vmatpush1.bf16.msra.mxu0 %v434
        %445 = vmatprep.subr.bf16.mxu0 0
        %446 = vmatpush1.bf16.msra.mxu0 %v433
        %447 = vmatprep.subr.bf16.mxu0 0
        %448 = vmatpush1.bf16.msra.mxu0 %v432
        %449 = vmatprep.subr.bf16.mxu0 0
        %450 = vmatpush1.bf16.msra.mxu0 %v431
        %451 = vmatprep.subr.bf16.mxu0 0
        %452 = vmatpush1.bf16.msra.mxu0 %v430
        %453 = vmatprep.subr.bf16.mxu0 0
        %454 = vmatpush1.bf16.msra.mxu0 %v429
        %455 = vmatprep.subr.bf16.mxu0 0
        %456 = vmatpush1.bf16.msra.mxu0 %v428
        %457 = vmatprep.subr.bf16.mxu0 0
        %458 = vmatpush1.bf16.msra.mxu0 %v427
        %459 = vmatprep.subr.bf16.mxu0 0
        %460 = vmatpush2.bf16.msra.mxu0 0
        %461 = vmatprep.subr.bf16.mxu0 0
        %462 = vmatpush2.bf16.msra.mxu0 0
        %463 = vmatprep.subr.bf16.mxu0 0
        %464 = vmatpush2.bf16.msra.mxu0 0
        %465 = vmatprep.subr.bf16.mxu0 0
        %466 = vmatpush2.bf16.msra.mxu0 0
        %467 = vmatprep.subr.bf16.mxu0 0
        %468 = vmatpush2.bf16.msra.mxu0 0
        %469 = vmatprep.subr.bf16.mxu0 0
        %470 = vmatpush2.bf16.msra.mxu0 0
        %471 = vmatprep.subr.bf16.mxu0 0
        %472 = vmatpush2.bf16.msra.mxu0 0
        %473 = vmatprep.subr.bf16.mxu0 0
        %474 = vmatpush2.bf16.msra.mxu0 0
        %475 = vmatprep.mubr.bf16.mxu0 0
        %476 = vmatmul.mubr.bf16.gmra.mxu0 %v368
        %v477 = vpop.f32.mrf.mxu0
        %v478 = vadd.f32 %v393, %v477
        %v479 = vpop.f32.mrf.mxu0
        %v480 = vpop.f32.mrf.mxu0
        %v481 = vadd.f32 %v393, %v480
        %v482 = vpop.f32.mrf.mxu0
        %483 = vmatprep.mubr.bf16.mxu0 0
        %484 = vmatmul.mubr.bf16.gmra.mxu0 %v369
        %v485 = vpop.f32.mrf.mxu0
        %v486 = vadd.f32 %v393, %v485
        %v487 = vpop.f32.mrf.mxu0
        %v488 = vpop.f32.mrf.mxu0
        %v489 = vadd.f32 %v393, %v488
        %v490 = vpop.f32.mrf.mxu0
        %491 = vmatprep.mubr.bf16.mxu0 0
        %492 = vmatmul.mubr.bf16.gmra.mxu0 %v370
        %v493 = vpop.f32.mrf.mxu0
        %v494 = vadd.f32 %v393, %v493
        %v495 = vpop.f32.mrf.mxu0
        %v496 = vpop.f32.mrf.mxu0
        %v497 = vadd.f32 %v393, %v496
        %v498 = vpop.f32.mrf.mxu0
        %499 = vmatprep.mubr.bf16.mxu0 0
        %500 = vmatmul.mubr.bf16.gmra.mxu0 %v371
        %v501 = vpop.f32.mrf.mxu0
        %v502 = vadd.f32 %v393, %v501
        %v503 = vpop.f32.mrf.mxu0
        %v504 = vpop.f32.mrf.mxu0
        %v505 = vadd.f32 %v393, %v504
        %v506 = vpop.f32.mrf.mxu0
        %507 = vdwg.mxu0
        %vm508 = vcmask 130048
        %509 = vst.msk [vmem:[%s226] sm:$0xff] %vm508, %v478
        %510 = vst.msk [vmem:[%s226 + $0x8] sm:$0xff] %vm508, %v481
        %511 = vst.msk [vmem:[%s226 + $0x10] sm:$0xff] %vm508, %v486
        %512 = vst.msk [vmem:[%s226 + $0x18] sm:$0xff] %vm508, %v489
        %513 = vst.msk [vmem:[%s226 + $0x20] sm:$0xff] %vm508, %v494
        %514 = vst.msk [vmem:[%s226 + $0x28] sm:$0xff] %vm508, %v497
        %515 = vst.msk [vmem:[%s226 + $0x30] sm:$0xff] %vm508, %v502
        %516 = vst.msk [vmem:[%s226 + $0x38] sm:$0xff] %vm508, %v505
        %s517 = sand.u32 %s134, 1
        %s518 = sand.u32 %s134, 1
        %s519 = smul.addr %s518, 64
        %s520 = scalar_lea.vmem [#allocation2], %s519
        // Predicated region
        $region41: #{regular_mlp_forward.1} parent=39 // pred_check
          %p521 = pneg %p144
        $region42: #{regular_mlp_forward.1} parent=39 // pred_check_branch
          %523 = sbr.rel (%p521) target = $region44
        $region43: #{regular_mlp_forward.1} parent=39 // pred_region
          %s524 = smul.u32 8, %s16
          %s525 = ssub.s32 25, %s524
          %p526 = scmp.lt.s32.totalorder %s525, 8
          %s527 = scalar_select %p526, %s525, 8
          %s528 = smul.u32 128, %s527
          %p529 = scmp.ne.s32.totalorder 0, %s528
          %s530 = smul.addr %s524, 8
          %s531 = scalar_lea.vmem %s5, %s530
          // Predicated region
          $region45: #{regular_mlp_forward.1} parent=43 // pred_check
            %p532 = pneg %p529
          $region46: #{regular_mlp_forward.1} parent=43 // pred_check_branch
            %534 = sbr.rel (%p532) target = $region48
          $region47: #{regular_mlp_forward.1} parent=43 // pred_region
            // Predicated region
            $region49: #{regular_mlp_forward.1} parent=47 // pred_check
              _
            $region50: #{regular_mlp_forward.1} parent=47 // pred_check_branch
              %536 = sbr.rel (0) target = $region52
            $region51: #{regular_mlp_forward.1} parent=47 // pred_region
              // Predicated region
              $region71: #{regular_mlp_forward.1} parent=51 // pred_check
                _
              $region72: #{regular_mlp_forward.1} parent=51 // pred_check_branch
                %600 = sbr.rel (0) target = $region74
              $region73: #{regular_mlp_forward.1} parent=51 // pred_region
                %s601 = sshrl.u32 %s527, 3
                // While loop
                $region75: #{regular_mlp_forward.1} parent=73 // loop_pre_header
                  _
                $region76: #{regular_mlp_forward.1} parent=73 // loop_header
                  %s603 = sphi 0, %s605
                  %p604 = scmp.ge.s32.totalorder %s603, %s601
                  %s608 = sphi 0, %s629
                  %s609 = sphi %s520, %s632
                  %s610 = sphi %s531, %s633
                $region77: #{regular_mlp_forward.1} parent=73 // loop_header_branch
                  %607 = sbr.rel (%p604) target = $region81
                $region78: #{regular_mlp_forward.1} parent=73 // loop_body
                  %v611 = vld [vmem:[%s609] sm:$0xff]
                  %612 = vst [vmem:[%s610] sm:$0xff] %v611
                  %v613 = vld [vmem:[%s609 + $0x8] sm:$0xff]
                  %614 = vst [vmem:[%s610 + $0x8] sm:$0xff] %v613
                  %v615 = vld [vmem:[%s609 + $0x10] sm:$0xff]
                  %616 = vst [vmem:[%s610 + $0x10] sm:$0xff] %v615
                  %v617 = vld [vmem:[%s609 + $0x18] sm:$0xff]
                  %618 = vst [vmem:[%s610 + $0x18] sm:$0xff] %v617
                  %v619 = vld [vmem:[%s609 + $0x20] sm:$0xff]
                  %620 = vst [vmem:[%s610 + $0x20] sm:$0xff] %v619
                  %v621 = vld [vmem:[%s609 + $0x28] sm:$0xff]
                  %622 = vst [vmem:[%s610 + $0x28] sm:$0xff] %v621
                  %v623 = vld [vmem:[%s609 + $0x30] sm:$0xff]
                  %624 = vst [vmem:[%s610 + $0x30] sm:$0xff] %v623
                  %v625 = vld [vmem:[%s609 + $0x38] sm:$0xff]
                  %626 = vst [vmem:[%s610 + $0x38] sm:$0xff] %v625
                  %s627 = sadd.s32 1, %s608
                  %p628 = scmp.ge.s32.totalorder %s627, %s601
                  %s629 = scalar_select %p628, 0, %s627
                  %s630 = smul.u32 %s629, 64
                  %s631 = smul.u32 %s629, 64
                  %s632 = scalar_lea.vmem %s520, %s630 [#allocation2]
                  %s633 = scalar_lea.vmem %s531, %s631
                $region79: #{regular_mlp_forward.1} parent=73 // loop_footer
                  %s605 = sadd.s32 %s603, 1
                $region80: #{regular_mlp_forward.1} parent=73 // loop_footer_branch
                  %602 = sbr.rel target = $region76
                $region81: #{regular_mlp_forward.1} parent=73 // loop_exit
                  _
                %s634 = sshrl.u32 %s527, 3
                %s635 = sand.u32 %s527, 7
                %s636 = smul.u32 %s634, 8
                %s637 = smul.u32 8, %s636
                %s638 = scalar_lea.vmem %s520, %s637 [#allocation2]
                %s639 = smul.u32 8, %s636
                %s640 = scalar_lea.vmem %s531, %s639
                // While loop
                $region82: #{regular_mlp_forward.1} parent=73 // loop_pre_header
                  _
                $region83: #{regular_mlp_forward.1} parent=73 // loop_header
                  %s642 = sphi 0, %s644
                  %p643 = scmp.ge.s32.totalorder %s642, %s635
                  %s647 = sphi 0, %s654
                  %s648 = sphi %s638, %s657
                  %s649 = sphi %s640, %s658
                $region84: #{regular_mlp_forward.1} parent=73 // loop_header_branch
                  %646 = sbr.rel (%p643) target = $region88
                $region85: #{regular_mlp_forward.1} parent=73 // loop_body
                  %v650 = vld [vmem:[%s648] sm:$0xff]
                  %651 = vst [vmem:[%s649] sm:$0xff] %v650
                  %s652 = sadd.s32 1, %s647
                  %p653 = scmp.ge.s32.totalorder %s652, %s635
                  %s654 = scalar_select %p653, 0, %s652
                  %s655 = smul.u32 %s654, 8
                  %s656 = smul.u32 %s654, 8
                  %s657 = scalar_lea.vmem %s638, %s655 [#allocation2]
                  %s658 = scalar_lea.vmem %s640, %s656
                $region86: #{regular_mlp_forward.1} parent=73 // loop_footer
                  %s644 = sadd.s32 %s642, 1
                $region87: #{regular_mlp_forward.1} parent=73 // loop_footer_branch
                  %641 = sbr.rel target = $region83
                $region88: #{regular_mlp_forward.1} parent=73 // loop_exit
                  _
              $region74: #{regular_mlp_forward.1} parent=51 // pred_fallthru
                _
              // Predicated region
              $region89: #{regular_mlp_forward.1} parent=51 // pred_check
                _
              $region90: #{regular_mlp_forward.1} parent=51 // pred_check_branch
                %660 = sbr.rel target = $region92
              $region91: #{regular_mlp_forward.1} parent=51 // pred_region
                _
              $region92: #{regular_mlp_forward.1} parent=51 // pred_fallthru
                _
            $region52: #{regular_mlp_forward.1} parent=47 // pred_fallthru
              _
            // Predicated region
            $region53: #{regular_mlp_forward.1} parent=47 // pred_check
              _
            $region54: #{regular_mlp_forward.1} parent=47 // pred_check_branch
              %538 = sbr.rel target = $region56
            $region55: #{regular_mlp_forward.1} parent=47 // pred_region
              %s540 = ssub.s32 256, 1
              %s541 = sshrl.u32 %s527, 3
              // While loop
              $region57: #{regular_mlp_forward.1} parent=55 // loop_pre_header
                _
              $region58: #{regular_mlp_forward.1} parent=55 // loop_header
                %s543 = sphi 0, %s545
                %p544 = scmp.ge.s32.totalorder %s543, %s541
                %s548 = sphi 0, %s569
                %s549 = sphi %s520, %s572
                %s550 = sphi %s531, %s573
              $region59: #{regular_mlp_forward.1} parent=55 // loop_header_branch
                %547 = sbr.rel (%p544) target = $region63
              $region60: #{regular_mlp_forward.1} parent=55 // loop_body
                %v551 = vld [vmem:[%s549] sm:%s540]
                %552 = vst [vmem:[%s550] sm:%s540] %v551
                %v553 = vld [vmem:[%s549 + $0x8] sm:%s540]
                %554 = vst [vmem:[%s550 + $0x8] sm:%s540] %v553
                %v555 = vld [vmem:[%s549 + $0x10] sm:%s540]
                %556 = vst [vmem:[%s550 + $0x10] sm:%s540] %v555
                %v557 = vld [vmem:[%s549 + $0x18] sm:%s540]
                %558 = vst [vmem:[%s550 + $0x18] sm:%s540] %v557
                %v559 = vld [vmem:[%s549 + $0x20] sm:%s540]
                %560 = vst [vmem:[%s550 + $0x20] sm:%s540] %v559
                %v561 = vld [vmem:[%s549 + $0x28] sm:%s540]
                %562 = vst [vmem:[%s550 + $0x28] sm:%s540] %v561
                %v563 = vld [vmem:[%s549 + $0x30] sm:%s540]
                %564 = vst [vmem:[%s550 + $0x30] sm:%s540] %v563
                %v565 = vld [vmem:[%s549 + $0x38] sm:%s540]
                %566 = vst [vmem:[%s550 + $0x38] sm:%s540] %v565
                %s567 = sadd.s32 1, %s548
                %p568 = scmp.ge.s32.totalorder %s567, %s541
                %s569 = scalar_select %p568, 0, %s567
                %s570 = smul.u32 %s569, 64
                %s571 = smul.u32 %s569, 64
                %s572 = scalar_lea.vmem %s520, %s570 [#allocation2]
                %s573 = scalar_lea.vmem %s531, %s571
              $region61: #{regular_mlp_forward.1} parent=55 // loop_footer
                %s545 = sadd.s32 %s543, 1
              $region62: #{regular_mlp_forward.1} parent=55 // loop_footer_branch
                %542 = sbr.rel target = $region58
              $region63: #{regular_mlp_forward.1} parent=55 // loop_exit
                _
              %s574 = sshrl.u32 %s527, 3
              %s575 = sand.u32 %s527, 7
              %s576 = smul.u32 %s574, 8
              %s577 = smul.u32 8, %s576
              %s578 = scalar_lea.vmem %s520, %s577 [#allocation2]
              %s579 = smul.u32 8, %s576
              %s580 = scalar_lea.vmem %s531, %s579
              // While loop
              $region64: #{regular_mlp_forward.1} parent=55 // loop_pre_header
                _
              $region65: #{regular_mlp_forward.1} parent=55 // loop_header
                %s582 = sphi 0, %s584
                %p583 = scmp.ge.s32.totalorder %s582, %s575
                %s587 = sphi 0, %s594
                %s588 = sphi %s578, %s597
                %s589 = sphi %s580, %s598
              $region66: #{regular_mlp_forward.1} parent=55 // loop_header_branch
                %586 = sbr.rel (%p583) target = $region70
              $region67: #{regular_mlp_forward.1} parent=55 // loop_body
                %v590 = vld [vmem:[%s588] sm:%s540]
                %591 = vst [vmem:[%s589] sm:%s540] %v590
                %s592 = sadd.s32 1, %s587
                %p593 = scmp.ge.s32.totalorder %s592, %s575
                %s594 = scalar_select %p593, 0, %s592
                %s595 = smul.u32 %s594, 8
                %s596 = smul.u32 %s594, 8
                %s597 = scalar_lea.vmem %s578, %s595 [#allocation2]
                %s598 = scalar_lea.vmem %s580, %s596
              $region68: #{regular_mlp_forward.1} parent=55 // loop_footer
                %s584 = sadd.s32 %s582, 1
              $region69: #{regular_mlp_forward.1} parent=55 // loop_footer_branch
                %581 = sbr.rel target = $region65
              $region70: #{regular_mlp_forward.1} parent=55 // loop_exit
                _
            $region56: #{regular_mlp_forward.1} parent=47 // pred_fallthru
              _
          $region48: #{regular_mlp_forward.1} parent=43 // pred_fallthru
            _
          %661 = vnop
        $region44: #{regular_mlp_forward.1} parent=39 // pred_fallthru
          _
      $region40: #{regular_mlp_forward.1} parent=5 // pred_fallthru
        _
      %p662 = scmp.le.s32.totalorder 2, %s11
      // Predicated region
      $region93: #{regular_mlp_forward.1} parent=5 // pred_check
        %p663 = pneg %p662
      $region94: #{regular_mlp_forward.1} parent=5 // pred_check_branch
        %665 = sbr.rel (%p663) target = $region96
      $region95: #{regular_mlp_forward.1} parent=5 // pred_region
        %s666 = ssub.s32 %s11, 2
        // Predicated region
        $region97: #{regular_mlp_forward.1} parent=95 // pred_check
          %p667 = pneg %p150
        $region98: #{regular_mlp_forward.1} parent=95 // pred_check_branch
          %669 = sbr.rel (%p667) target = $region100
        $region99: #{regular_mlp_forward.1} parent=95 // pred_region
          %s670 = sand.u32 %s135, 1
          %s671 = sand.u32 %s135, 1
          %s672 = smul.addr %s671, 64
          %s673 = scalar_lea.vmem [#allocation2], %s672
        $region100: #{regular_mlp_forward.1} parent=95 // pred_fallthru
          _
      $region96: #{regular_mlp_forward.1} parent=5 // pred_fallthru
        _
    $region6: #{regular_mlp_forward.1} parent=1 // loop_footer
      %s15 = sadd.s32 1, %s11
    $region7: #{regular_mlp_forward.1} parent=1 // loop_footer_branch
      %10 = sbr.rel target = $region3
    $region8: #{regular_mlp_forward.1} parent=1 // loop_exit
      _

</llo_original>
